<compile_context>
chip_gen: v7x
topology: tpu7x:2x2x1
jax: 0.10.0
libtpu: 0.0.40
codegen_flags: <defaults>
</compile_context>

<pallas_src>
import functools

import jax
import jax.numpy as jnp
from jax.experimental import pallas as pl
from jax.experimental.pallas import tpu as pltpu


def _round_up(x, m):
    return ((x + m - 1) // m) * m


def _cdilated_bn_kernel(x_ref, b_ref, agg_ref, g_ref, bt_ref, o_ref, xp_ref, *,
                        k_size, dil, pad, h_out, inv_count, eps):
    # x_ref  : (N, H, K_lanes)      lane-folded input, W*Cin zero-padded to 128*j
    # b_ref  : (kSize, K_lanes, L)  per-kh banded (block-Toeplitz) weight matrices
    # agg_ref: (L, L)               0/1 same-channel aggregation matrix
    # g_ref  : (1, L)               BN gamma broadcast to the (wo, co) lane layout
    # bt_ref : (1, L)               BN beta, same layout
    # o_ref  : (N*Ho, L)            lane-dense output, L = round_up(Wo*Cout, 128)
    # xp_ref : (N, Hp, K_lanes)     VMEM scratch: H-zero-padded input
    n, h, k_lanes = x_ref.shape
    m_rows, l_out = o_ref.shape
    hp = xp_ref.shape[1]

    # ---- vertical zero padding: zero ONLY the halo rows, then copy interior.
    #      (horizontal padding is absorbed into b_ref; x is already f32)
    if pad > 0:
        halo = jnp.zeros((n, pad, k_lanes), jnp.float32)
        xp_ref[:, :pad, :] = halo
        xp_ref[:, pad + h:hp, :] = halo
    xp_ref[:, pad:pad + h, :] = x_ref[...]

    # ---- dilated conv as k_size banded matmuls: the kw taps and the
    #      horizontal zero padding live inside b_ref, so the LHS per kh is just
    #      a sublane-offset slice of the padded input.  The accumulator is only
    #      (N*Ho, L) = 4 vregs at the test shape -> lives in registers.
    acc = None
    for kh in range(k_size):
        lhs = xp_ref[:, kh * dil:kh * dil + h_out, :].reshape(m_rows, k_lanes)
        part = jnp.dot(lhs, b_ref[kh], preferred_element_type=jnp.float32)
        acc = part if acc is None else acc + part

    # ---- fused training-mode BatchNorm2d, two-pass (mean, then centered var).
    # Per-channel reduce + broadcast over the (wo, co)-folded lanes is one 0/1
    # aggregation matmul (MXU); the row reduction is a cheap sublane reduce.
    mean_b = jnp.sum(
        jnp.dot(acc, agg_ref[...], preferred_element_type=jnp.float32),
        axis=0, keepdims=True) * inv_count
    centered = acc - mean_b
    var_b = jnp.sum(
        jnp.dot(centered * centered, agg_ref[...],
                preferred_element_type=jnp.float32),
        axis=0, keepdims=True) * inv_count
    inv_std = jax.lax.rsqrt(var_b + eps)
    o_ref[...] = (centered * inv_std * g_ref[...] + bt_ref[...]).astype(o_ref.dtype)


def cdilated_b_forward(x_nchw, weight_oihw, gamma, beta, *,
                       kSize, stride=1, d=1, groups=1, eps=1e-5):
    # TODO(synk): stride>1 and groups>1 conv paths are not implemented
    #             (module defaults stride=1, groups=1 are what the test uses).
    assert stride == 1 and groups == 1

    n, c_in, h, w = x_nchw.shape
    c_out = weight_oihw.shape[0]
    pad = ((kSize - 1) // 2) * d
    h_out = h + 2 * pad - d * (kSize - 1)
    w_out = w + 2 * pad - d * (kSize - 1)
    hp = h + 2 * pad
    m_rows = n * h_out

    wc = w * c_in                       # folded input lane width
    k_lanes = _round_up(wc, 128)        # lane-dense LHS / single MXU K tile
    l_real = w_out * c_out              # folded output lane width
    l_out = _round_up(l_real, 128)      # lane-dense output / accumulator

    # ---- lane-folded input: (N, H, W*Cin), zero-padded to k_lanes lanes -----
    x_f = jnp.transpose(x_nchw, (0, 2, 3, 1)).astype(jnp.float32).reshape(n, h, wc)
    x_in = jnp.zeros((n, h, k_lanes), jnp.float32).at[:, :, :wc].set(x_f)

    # ---- banded (block-Toeplitz) weight matrices, one per kernel row kh -----
    # b[kh, wi*Cin+ci, wo*Cout+co] = W[co, ci, kh, kw] iff wi == wo + kw*d - pad
    # (zero otherwise); this also absorbs the horizontal zero padding.
    # Built with an exact 0/1-mask multiply + sum (no reduced-precision einsum).
    wt = jnp.transpose(weight_oihw, (2, 3, 1, 0)).astype(jnp.float32)  # (kh,kw,ci,co)
    sel = (jnp.arange(w)[None, :, None] ==
           (jnp.arange(w_out)[None, None, :] +
            jnp.arange(kSize)[:, None, None] * d - pad)).astype(jnp.float32)  # (kw,W,Wo)
    b_full = jnp.sum(
        sel[None, :, :, None, :, None] * wt[:, :, None, :, None, :],
        axis=1)                                           # (kh, W, Cin, Wo, Cout)
    b_real = b_full.reshape(kSize, wc, l_real)
    b_mat = jnp.zeros((kSize, k_lanes, l_out),
                      jnp.float32).at[:, :wc, :l_real].set(b_real)

    # ---- 0/1 same-channel aggregation matrix over the (wo, co) lane layout --
    lane = jnp.arange(l_out)
    real = lane < l_real
    same_c = (lane[:, None] % c_out) == (lane[None, :] % c_out)
    agg = (same_c & real[:, None] & real[None, :]).astype(jnp.float32)

    # ---- gamma / beta broadcast into the (wo, co) lane layout ---------------
    g_b = jnp.zeros((1, l_out), jnp.float32).at[0, :l_real].set(
        jnp.tile(gamma.astype(jnp.float32), w_out))
    bt_b = jnp.zeros((1, l_out), jnp.float32).at[0, :l_real].set(
        jnp.tile(beta.astype(jnp.float32), w_out))

    kernel = functools.partial(
        _cdilated_bn_kernel, k_size=kSize, dil=d, pad=pad, h_out=h_out,
        inv_count=1.0 / float(n * h_out * w_out), eps=eps)

    # TODO(synk): for large N*H*W this whole-problem single block should become
    # an M-row-tiled grid ("parallel" rows to use both v7x TensorCores) with a
    # two-pass BN (accumulate per-channel sum/sumsq scratch, then a normalize
    # pass over the conv output). At the test shape the full working set is
    # well under 1 MiB of VMEM, so one fused step has the least overhead.
    out = pl.pallas_call(
        kernel,
        out_shape=jax.ShapeDtypeStruct((m_rows, l_out), jnp.float32),
        grid=(1,),
        in_specs=[
            pl.BlockSpec((n, h, k_lanes), lambda i: (0, 0, 0)),
            pl.BlockSpec((kSize, k_lanes, l_out), lambda i: (0, 0, 0)),
            pl.BlockSpec((l_out, l_out), lambda i: (0, 0)),
            pl.BlockSpec((1, l_out), lambda i: (0, 0)),
            pl.BlockSpec((1, l_out), lambda i: (0, 0)),
        ],
        out_specs=pl.BlockSpec((m_rows, l_out), lambda i: (0, 0)),
        scratch_shapes=[
            pltpu.VMEM((n, hp, k_lanes), jnp.float32),   # H-zero-padded input
        ],
        compiler_params=pltpu.CompilerParams(
            dimension_semantics=("arbitrary",),
        ),
    )(x_in, b_mat, agg, g_b, bt_b)

    y = out[:, :l_real].reshape(n, h_out, w_out, c_out)
    return jnp.transpose(y, (0, 3, 1, 2))


def _reference(x_nchw, weight_oihw, gamma, beta, *, kSize, d, eps=1e-5):
    pad = ((kSize - 1) // 2) * d
    conv = jax.lax.conv_general_dilated(
        x_nchw.astype(jnp.float32), weight_oihw.astype(jnp.float32),
        window_strides=(1, 1), padding=((pad, pad), (pad, pad)),
        rhs_dilation=(d, d), dimension_numbers=("NCHW", "OIHW", "NCHW"))
    mean = conv.mean(axis=(0, 2, 3), keepdims=True)
    var = ((conv - mean) ** 2).mean(axis=(0, 2, 3), keepdims=True)
    return ((conv - mean) * jax.lax.rsqrt(var + eps)
            * gamma.reshape(1, -1, 1, 1) + beta.reshape(1, -1, 1, 1))


if __name__ == "__main__":
    key = jax.random.PRNGKey(0)
    k_x, k_w, k_g, k_b = jax.random.split(key, 4)

    N, nIn, nOut, H, W = 2, 4, 8, 16, 16
    kSize, d = 3, 2

    x = jax.random.normal(k_x, (N, nIn, H, W), dtype=jnp.float32)
    # Conv2d weight (OIHW), bias=False; BN affine params (gamma, beta).
    weight = 0.1 * jax.random.normal(k_w, (nOut, nIn, kSize, kSize),
                                     dtype=jnp.float32)
    gamma = 1.0 + 0.1 * jax.random.normal(k_g, (nOut,), dtype=jnp.float32)
    beta = 0.1 * jax.random.normal(k_b, (nOut,), dtype=jnp.float32)

    out = cdilated_b_forward(x, weight, gamma, beta, kSize=kSize, d=d)
    out = jax.block_until_ready(out)

    ref = _reference(x, weight, gamma, beta, kSize=kSize, d=d)
    assert out.shape == ref.shape == (N, nOut, H, W)
    assert jnp.allclose(out, ref, atol=1e-4, rtol=1e-4), "mismatch vs reference"

    print("KERNEL_OK")
</pallas_src>

<mosaic_0001>
module attributes {stable_mosaic.version = 11 : i64} {
  func.func @_cdilated_bn_kernel(%arg0: i32, %arg1: memref<2x16x128xf32, #tpu.memory_space<vmem>>, %arg2: memref<3x128x128xf32, #tpu.memory_space<vmem>>, %arg3: memref<128x128xf32, #tpu.memory_space<vmem>>, %arg4: memref<1x128xf32, #tpu.memory_space<vmem>>, %arg5: memref<1x128xf32, #tpu.memory_space<vmem>>, %arg6: memref<32x128xf32, #tpu.memory_space<vmem>>, %arg7: memref<2x20x128xf32, #tpu.memory_space<vmem>>) attributes {dimension_semantics = [#tpu.dimension_semantics<arbitrary>], iteration_bounds = array<i64: 1>, scalar_prefetch = 0 : i64, scratch_operands = 1 : i64, tpu.core_type = #tpu.core_type<tc>, window_params = [{pipeline_mode = #tpu.pipeline_mode<synchronous>, transform_indices = @transform_0, window_bounds = array<i64: 2, 16, 128>}, {pipeline_mode = #tpu.pipeline_mode<synchronous>, transform_indices = @transform_1, window_bounds = array<i64: 3, 128, 128>}, {pipeline_mode = #tpu.pipeline_mode<synchronous>, transform_indices = @transform_2, window_bounds = array<i64: 128, 128>}, {pipeline_mode = #tpu.pipeline_mode<synchronous>, transform_indices = @transform_3, window_bounds = array<i64: 1, 128>}, {pipeline_mode = #tpu.pipeline_mode<synchronous>, transform_indices = @transform_4, window_bounds = array<i64: 1, 128>}, {pipeline_mode = #tpu.pipeline_mode<synchronous>, transform_indices = @transform_5, window_bounds = array<i64: 32, 128>}]} {
    %cst = arith.constant 0.000000e+00 : f32
    %0 = vector.broadcast %cst : f32 to vector<2x2x128xf32>
    %c0 = arith.constant 0 : index
    %c0_0 = arith.constant 0 : index
    %c0_1 = arith.constant 0 : index
    %1 = vector.load %arg7[%c0, %c0_0, %c0_1] : memref<2x20x128xf32, #tpu.memory_space<vmem>>, vector<2x2x128xf32>
    tpu.vector_store %arg7[%c0, %c0_0, %c0_1], %0 {strides = array<i32>} : memref<2x20x128xf32, #tpu.memory_space<vmem>>, vector<2x2x128xf32>,
    %c0_2 = arith.constant 0 : index
    %c18 = arith.constant 18 : index
    %c0_3 = arith.constant 0 : index
    %2 = vector.load %arg7[%c0_2, %c18, %c0_3] : memref<2x20x128xf32, #tpu.memory_space<vmem>>, vector<2x2x128xf32>
    tpu.vector_store %arg7[%c0_2, %c18, %c0_3], %0 {strides = array<i32>} : memref<2x20x128xf32, #tpu.memory_space<vmem>>, vector<2x2x128xf32>,
    %c0_4 = arith.constant 0 : index
    %c0_5 = arith.constant 0 : index
    %c0_6 = arith.constant 0 : index
    %3 = vector.load %arg1[%c0_4, %c0_5, %c0_6] : memref<2x16x128xf32, #tpu.memory_space<vmem>>, vector<2x16x128xf32>
    %c0_7 = arith.constant 0 : index
    %c2 = arith.constant 2 : index
    %c0_8 = arith.constant 0 : index
    %4 = vector.load %arg7[%c0_7, %c2, %c0_8] : memref<2x20x128xf32, #tpu.memory_space<vmem>>, vector<2x16x128xf32>
    tpu.vector_store %arg7[%c0_7, %c2, %c0_8], %3 {strides = array<i32>} : memref<2x20x128xf32, #tpu.memory_space<vmem>>, vector<2x16x128xf32>,
    %c0_9 = arith.constant 0 : index
    %c0_10 = arith.constant 0 : index
    %c0_11 = arith.constant 0 : index
    %5 = vector.load %arg7[%c0_9, %c0_10, %c0_11] : memref<2x20x128xf32, #tpu.memory_space<vmem>>, vector<2x16x128xf32>
    %6 = vector.shape_cast %5 : vector<2x16x128xf32> to vector<32x128xf32>
    %c0_12 = arith.constant 0 : index
    %c0_13 = arith.constant 0 : index
    %c0_14 = arith.constant 0 : index
    %7 = vector.load %arg2[%c0_12, %c0_13, %c0_14] : memref<3x128x128xf32, #tpu.memory_space<vmem>>, vector<1x128x128xf32>
    %8 = vector.shape_cast %7 : vector<1x128x128xf32> to vector<128x128xf32>
    %cst_15 = arith.constant dense<0.000000e+00> : vector<32x128xf32>
    %9 = tpu.matmul %6, %8, %cst_15 {dimension_numbers = #tpu.dot_dimension_numbers<[1], [0], [0], [1], [0, 0, 1, 1], [], []>} : vector<32x128xf32>, vector<128x128xf32>, vector<32x128xf32> -> vector<32x128xf32>
    %c0_16 = arith.constant 0 : index
    %c2_17 = arith.constant 2 : index
    %c0_18 = arith.constant 0 : index
    %10 = vector.load %arg7[%c0_16, %c2_17, %c0_18] : memref<2x20x128xf32, #tpu.memory_space<vmem>>, vector<2x16x128xf32>
    %11 = vector.shape_cast %10 : vector<2x16x128xf32> to vector<32x128xf32>
    %c1 = arith.constant 1 : index
    %c0_19 = arith.constant 0 : index
    %c0_20 = arith.constant 0 : index
    %12 = vector.load %arg2[%c1, %c0_19, %c0_20] : memref<3x128x128xf32, #tpu.memory_space<vmem>>, vector<1x128x128xf32>
    %13 = vector.shape_cast %12 : vector<1x128x128xf32> to vector<128x128xf32>
    %cst_21 = arith.constant dense<0.000000e+00> : vector<32x128xf32>
    %14 = tpu.matmul %11, %13, %cst_21 {dimension_numbers = #tpu.dot_dimension_numbers<[1], [0], [0], [1], [0, 0, 1, 1], [], []>} : vector<32x128xf32>, vector<128x128xf32>, vector<32x128xf32> -> vector<32x128xf32>
    %15 = arith.addf %9, %14 : vector<32x128xf32>
    %c0_22 = arith.constant 0 : index
    %c4 = arith.constant 4 : index
    %c0_23 = arith.constant 0 : index
    %16 = vector.load %arg7[%c0_22, %c4, %c0_23] : memref<2x20x128xf32, #tpu.memory_space<vmem>>, vector<2x16x128xf32>
    %17 = vector.shape_cast %16 : vector<2x16x128xf32> to vector<32x128xf32>
    %c2_24 = arith.constant 2 : index
    %c0_25 = arith.constant 0 : index
    %c0_26 = arith.constant 0 : index
    %18 = vector.load %arg2[%c2_24, %c0_25, %c0_26] : memref<3x128x128xf32, #tpu.memory_space<vmem>>, vector<1x128x128xf32>
    %19 = vector.shape_cast %18 : vector<1x128x128xf32> to vector<128x128xf32>
    %cst_27 = arith.constant dense<0.000000e+00> : vector<32x128xf32>
    %20 = tpu.matmul %17, %19, %cst_27 {dimension_numbers = #tpu.dot_dimension_numbers<[1], [0], [0], [1], [0, 0, 1, 1], [], []>} : vector<32x128xf32>, vector<128x128xf32>, vector<32x128xf32> -> vector<32x128xf32>
    %21 = arith.addf %15, %20 : vector<32x128xf32>
    %c0_28 = arith.constant 0 : index
    %c0_29 = arith.constant 0 : index
    %22 = vector.load %arg3[%c0_28, %c0_29] : memref<128x128xf32, #tpu.memory_space<vmem>>, vector<128x128xf32>
    %cst_30 = arith.constant dense<0.000000e+00> : vector<32x128xf32>
    %23 = tpu.matmul %21, %22, %cst_30 {dimension_numbers = #tpu.dot_dimension_numbers<[1], [0], [0], [1], [0, 0, 1, 1], [], []>} : vector<32x128xf32>, vector<128x128xf32>, vector<32x128xf32> -> vector<32x128xf32>
    %cst_31 = arith.constant dense<0.000000e+00> : vector<128xf32>
    %24 = vector.multi_reduction <add>, %23, %cst_31 [0] : vector<32x128xf32> to vector<128xf32>
    %25 = vector.shape_cast %24 : vector<128xf32> to vector<1x128xf32>
    %cst_32 = arith.constant 0.001953125 : f32
    %26 = vector.broadcast %cst_32 : f32 to vector<1x128xf32>
    %27 = arith.mulf %25, %26 : vector<1x128xf32>
    %28 = vector.broadcast %27 : vector<1x128xf32> to vector<32x128xf32>
    %29 = arith.subf %21, %28 : vector<32x128xf32>
    %30 = arith.mulf %29, %29 : vector<32x128xf32>
    %c0_33 = arith.constant 0 : index
    %c0_34 = arith.constant 0 : index
    %31 = vector.load %arg3[%c0_33, %c0_34] : memref<128x128xf32, #tpu.memory_space<vmem>>, vector<128x128xf32>
    %cst_35 = arith.constant dense<0.000000e+00> : vector<32x128xf32>
    %32 = tpu.matmul %30, %31, %cst_35 {dimension_numbers = #tpu.dot_dimension_numbers<[1], [0], [0], [1], [0, 0, 1, 1], [], []>} : vector<32x128xf32>, vector<128x128xf32>, vector<32x128xf32> -> vector<32x128xf32>
    %cst_36 = arith.constant dense<0.000000e+00> : vector<128xf32>
    %33 = vector.multi_reduction <add>, %32, %cst_36 [0] : vector<32x128xf32> to vector<128xf32>
    %34 = vector.shape_cast %33 : vector<128xf32> to vector<1x128xf32>
    %cst_37 = arith.constant 0.001953125 : f32
    %35 = vector.broadcast %cst_37 : f32 to vector<1x128xf32>
    %36 = arith.mulf %34, %35 : vector<1x128xf32>
    %cst_38 = arith.constant 9.99999974E-6 : f32
    %37 = vector.broadcast %cst_38 : f32 to vector<1x128xf32>
    %38 = arith.addf %36, %37 : vector<1x128xf32>
    %39 = math.rsqrt %38 : vector<1x128xf32>
    %40 = vector.broadcast %39 : vector<1x128xf32> to vector<32x128xf32>
    %41 = arith.mulf %29, %40 : vector<32x128xf32>
    %c0_39 = arith.constant 0 : index
    %c0_40 = arith.constant 0 : index
    %42 = vector.load %arg4[%c0_39, %c0_40] : memref<1x128xf32, #tpu.memory_space<vmem>>, vector<1x128xf32>
    %43 = vector.broadcast %42 : vector<1x128xf32> to vector<32x128xf32>
    %44 = arith.mulf %41, %43 : vector<32x128xf32>
    %c0_41 = arith.constant 0 : index
    %c0_42 = arith.constant 0 : index
    %45 = vector.load %arg5[%c0_41, %c0_42] : memref<1x128xf32, #tpu.memory_space<vmem>>, vector<1x128xf32>
    %46 = vector.broadcast %45 : vector<1x128xf32> to vector<32x128xf32>
    %47 = arith.addf %44, %46 : vector<32x128xf32>
    %c0_43 = arith.constant 0 : index
    %c0_44 = arith.constant 0 : index
    %48 = vector.load %arg6[%c0_43, %c0_44] : memref<32x128xf32, #tpu.memory_space<vmem>>, vector<32x128xf32>
    tpu.vector_store %arg6[%c0_43, %c0_44], %47 {strides = array<i32>} : memref<32x128xf32, #tpu.memory_space<vmem>>, vector<32x128xf32>,
    return
  }
  func.func @transform_0(%arg0: i32) -> (i32, i32, i32) {
    %c0_i32 = arith.constant 0 : i32
    %c0_i32_0 = arith.constant 0 : i32
    %c0_i32_1 = arith.constant 0 : i32
    %c0_i32_2 = arith.constant 0 : i32
    return %c0_i32, %c0_i32_0, %c0_i32_1 : i32, i32, i32
  }
  func.func @transform_1(%arg0: i32) -> (i32, i32, i32) {
    %c0_i32 = arith.constant 0 : i32
    %c0_i32_0 = arith.constant 0 : i32
    %c0_i32_1 = arith.constant 0 : i32
    %c0_i32_2 = arith.constant 0 : i32
    return %c0_i32, %c0_i32_0, %c0_i32_1 : i32, i32, i32
  }
  func.func @transform_2(%arg0: i32) -> (i32, i32) {
    %c0_i32 = arith.constant 0 : i32
    %c0_i32_0 = arith.constant 0 : i32
    %c0_i32_1 = arith.constant 0 : i32
    return %c0_i32, %c0_i32_0 : i32, i32
  }
  func.func @transform_3(%arg0: i32) -> (i32, i32) {
    %c0_i32 = arith.constant 0 : i32
    %c0_i32_0 = arith.constant 0 : i32
    %c0_i32_1 = arith.constant 0 : i32
    return %c0_i32, %c0_i32_0 : i32, i32
  }
  func.func @transform_4(%arg0: i32) -> (i32, i32) {
    %c0_i32 = arith.constant 0 : i32
    %c0_i32_0 = arith.constant 0 : i32
    %c0_i32_1 = arith.constant 0 : i32
    return %c0_i32, %c0_i32_0 : i32, i32
  }
  func.func @transform_5(%arg0: i32) -> (i32, i32) {
    %c0_i32 = arith.constant 0 : i32
    %c0_i32_0 = arith.constant 0 : i32
    %c0_i32_1 = arith.constant 0 : i32
    return %c0_i32, %c0_i32_0 : i32, i32
  }
}

</mosaic_0001>

<llo_original>
// kernel: tpu_custom_call.1
$region0: #{tpu_custom_call.1}
  #allocation0 [shape = 'u32[]', space=smem, size = 0x4, offset = 0x4, fixed_abs, tag = 'smem constant byte address 0x4 - core index']
  #allocation1 [shape = 'u32[144,128]{1,0:T(1,128)}', space=vmem, size = 0x12000, scoped, tag = 'internal scratch']
  #allocation2 [shape = 'f32[2,20,128]{2,1,0:T(8,128)}', space=vmem, size = 0x6000, scoped, tag = 'scratch operand']
  %s0 = inlined_call_operand.hbm [shape: f32[2,16,128], index: 0, kind: input, shape index: {}]
  %s1 = inlined_call_operand.hbm [shape: f32[3,128,128], index: 1, kind: input, shape index: {}]
  %s2 = inlined_call_operand.hbm [shape: f32[128,128], index: 2, kind: input, shape index: {}]
  %s3 = inlined_call_operand.vmem [shape: f32[1,128], index: 3, kind: input, shape index: {}]
  %s4 = inlined_call_operand.vmem [shape: f32[1,128], index: 4, kind: input, shape index: {}]
  %s5 = inlined_call_operand.hbm [shape: f32[32,128], index: 5, kind: output, shape index: {}]
  %s6 = sld [smem:[#allocation0]]
  $region42: #{tpu_custom_call.1} parent=0
    _
  %s8 = ssub.s32 1, %s6
  %s9 = scalar_select 0, %s8, %s6
  $region1: #{tpu_custom_call.1} parent=0
    #allocation3 [shape = 'u8[16384]{0}', space=vmem, size = 0x4000, scoped, tag = 'input window, operand 0, single buffered']
    #allocation4 [shape = 's32[1]{0}', space=sflag, size = 0x4, scoped, tag = 'scoped memory for tpu_custom_call.1']
    #allocation5 [shape = 's32[1]{0}', space=sflag, size = 0x4, scoped, tag = 'scoped memory for tpu_custom_call.1']
    #allocation6 [shape = 'u8[196608]{0}', space=vmem, size = 0x30000, scoped, tag = 'input window, operand 1, single buffered']
    #allocation7 [shape = 's32[1]{0}', space=sflag, size = 0x4, scoped, tag = 'scoped memory for tpu_custom_call.1']
    #allocation8 [shape = 'u8[65536]{0}', space=vmem, size = 0x10000, scoped, tag = 'input window, operand 2, single buffered']
    #allocation9 [shape = 'u8[16384]{0}', space=vmem, size = 0x4000, scoped, tag = 'output window, operand 0, single buffered']
    %10 = vsyncpa [#allocation4], 0
    %11 = vsyncpa [#allocation7], 0
    %12 = vsyncpa [#allocation5], 0
    // Predicated region
    $region2: #{tpu_custom_call.1} parent=1 // pred_check
      _
    $region3: #{tpu_custom_call.1} parent=1 // pred_check_branch
      %14 = sbr.rel (0) target = $region5
    $region4: #{tpu_custom_call.1} parent=1 // pred_region
      %s16 = ssub.s32 512, 512
      %17 = vsyncadd [#allocation4], %s16
      %s18 = sshll.u32 [#allocation3], 4
      %s19 = int_to_ptr.vmem [resolvable:$true] %s18
      %24 = dma.hbm_to_vmem [thread:$0]  %s0, 512, %s19, [#allocation4], 128, 128, 8
    $region5: #{tpu_custom_call.1} parent=1 // pred_fallthru
      _
    // Predicated region
    $region6: #{tpu_custom_call.1} parent=1 // pred_check
      _
    $region7: #{tpu_custom_call.1} parent=1 // pred_check_branch
      %26 = sbr.rel (0) target = $region9
    $region8: #{tpu_custom_call.1} parent=1 // pred_region
      %s28 = ssub.s32 6144, 6144
      %29 = vsyncadd [#allocation7], %s28
      %s30 = sshll.u32 [#allocation6], 4
      %s31 = int_to_ptr.vmem [resolvable:$true] %s30
      %36 = dma.hbm_to_vmem [thread:$0]  %s1, 6144, %s31, [#allocation7], 128, 128, 8
    $region9: #{tpu_custom_call.1} parent=1 // pred_fallthru
      _
    // Predicated region
    $region10: #{tpu_custom_call.1} parent=1 // pred_check
      _
    $region11: #{tpu_custom_call.1} parent=1 // pred_check_branch
      %38 = sbr.rel (0) target = $region13
    $region12: #{tpu_custom_call.1} parent=1 // pred_region
      %s40 = ssub.s32 2048, 2048
      %41 = vsyncadd [#allocation7], %s40
      %s42 = sshll.u32 [#allocation8], 4
      %s43 = int_to_ptr.vmem [resolvable:$true] %s42
      %48 = dma.hbm_to_vmem [thread:$0]  %s2, 2048, %s43, [#allocation7], 128, 128, 8
    $region13: #{tpu_custom_call.1} parent=1 // pred_fallthru
      _
    // Predicated region
    $region14: #{tpu_custom_call.1} parent=1 // pred_check
      _
    $region15: #{tpu_custom_call.1} parent=1 // pred_check_branch
      %50 = sbr.rel (0) target = $region17
    $region16: #{tpu_custom_call.1} parent=1 // pred_region
      _
    $region17: #{tpu_custom_call.1} parent=1 // pred_fallthru
      _
    // Predicated region
    $region18: #{tpu_custom_call.1} parent=1 // pred_check
      _
    $region19: #{tpu_custom_call.1} parent=1 // pred_check_branch
      %52 = sbr.rel (0) target = $region21
    $region20: #{tpu_custom_call.1} parent=1 // pred_region
      _
    $region21: #{tpu_custom_call.1} parent=1 // pred_fallthru
      _
    // Predicated region
    $region22: #{tpu_custom_call.1} parent=1 // pred_check
      _
    $region23: #{tpu_custom_call.1} parent=1 // pred_check_branch
      %54 = sbr.rel (0) target = $region25
    $region24: #{tpu_custom_call.1} parent=1 // pred_region
      %55 = dma.done [#allocation4], 512
    $region25: #{tpu_custom_call.1} parent=1 // pred_fallthru
      _
    // Predicated region
    $region26: #{tpu_custom_call.1} parent=1 // pred_check
      _
    $region27: #{tpu_custom_call.1} parent=1 // pred_check_branch
      %57 = sbr.rel (0) target = $region29
    $region28: #{tpu_custom_call.1} parent=1 // pred_region
      %58 = dma.done [#allocation7], 6144
    $region29: #{tpu_custom_call.1} parent=1 // pred_fallthru
      _
    // Predicated region
    $region30: #{tpu_custom_call.1} parent=1 // pred_check
      _
    $region31: #{tpu_custom_call.1} parent=1 // pred_check_branch
      %60 = sbr.rel (0) target = $region33
    $region32: #{tpu_custom_call.1} parent=1 // pred_region
      %61 = dma.done [#allocation7], 2048
    $region33: #{tpu_custom_call.1} parent=1 // pred_fallthru
      _
    %62 = vst [vmem:[#allocation2] sm:$0x3] 0.0
    %63 = vst [vmem:[#allocation2 + $0x18] sm:$0x3] 0.0
    %64 = vst [vmem:[#allocation2 + $0x12] sm:$0x3] 0.0
    %65 = vst [vmem:[#allocation2 + $0x2a] sm:$0x3] 0.0
    %v66 = vld [vmem:[#allocation3] sm:$0xff]
    %v67 = vld [vmem:[#allocation3 + $0x8] sm:$0xff]
    %v68 = vld [vmem:[#allocation3 + $0x10] sm:$0xff]
    %v69 = vld [vmem:[#allocation3 + $0x18] sm:$0xff]
    %70 = vst [vmem:[#allocation2 + $0x2] sm:$0xff] %v66
    %71 = vst [vmem:[#allocation2 + $0xa] sm:$0xff] %v67
    %72 = vst [vmem:[#allocation2 + $0x1a] sm:$0xff] %v68
    %73 = vst [vmem:[#allocation2 + $0x22] sm:$0xff] %v69
    %v74 = vld [vmem:[#allocation2] sm:$0xff]
    %v75 = vld [vmem:[#allocation2 + $0x8] sm:$0xff]
    %v76 = vld [vmem:[#allocation2 + $0x18] sm:$0xff]
    %v77 = vld [vmem:[#allocation2 + $0x20] sm:$0xff]
    %v78 = vld [vmem:[#allocation6] sm:$0xff]
    %v79 = vld [vmem:[#allocation6 + $0x8] sm:$0xff]
    %v80 = vld [vmem:[#allocation6 + $0x10] sm:$0xff]
    %v81 = vld [vmem:[#allocation6 + $0x18] sm:$0xff]
    %v82 = vld [vmem:[#allocation6 + $0x20] sm:$0xff]
    %v83 = vld [vmem:[#allocation6 + $0x28] sm:$0xff]
    %v84 = vld [vmem:[#allocation6 + $0x30] sm:$0xff]
    %v85 = vld [vmem:[#allocation6 + $0x38] sm:$0xff]
    %v86 = vld [vmem:[#allocation6 + $0x40] sm:$0xff]
    %v87 = vld [vmem:[#allocation6 + $0x48] sm:$0xff]
    %v88 = vld [vmem:[#allocation6 + $0x50] sm:$0xff]
    %v89 = vld [vmem:[#allocation6 + $0x58] sm:$0xff]
    %v90 = vld [vmem:[#allocation6 + $0x60] sm:$0xff]
    %v91 = vld [vmem:[#allocation6 + $0x68] sm:$0xff]
    %v92 = vld [vmem:[#allocation6 + $0x70] sm:$0xff]
    %v93 = vld [vmem:[#allocation6 + $0x78] sm:$0xff]
    %v94 = vld [vmem:[#allocation2 + $0x2] sm:$0xff]
    %v95 = vld [vmem:[#allocation2 + $0xa] sm:$0xff]
    %v96 = vld [vmem:[#allocation2 + $0x1a] sm:$0xff]
    %v97 = vld [vmem:[#allocation2 + $0x22] sm:$0xff]
    %s98 = scalar_lea.vmem [#allocation6], 128
    %v99 = vld [vmem:[%s98] sm:$0xff]
    %v100 = vld [vmem:[%s98 + $0x8] sm:$0xff]
    %v101 = vld [vmem:[%s98 + $0x10] sm:$0xff]
    %v102 = vld [vmem:[%s98 + $0x18] sm:$0xff]
    %v103 = vld [vmem:[%s98 + $0x20] sm:$0xff]
    %v104 = vld [vmem:[%s98 + $0x28] sm:$0xff]
    %v105 = vld [vmem:[%s98 + $0x30] sm:$0xff]
    %v106 = vld [vmem:[%s98 + $0x38] sm:$0xff]
    %v107 = vld [vmem:[%s98 + $0x40] sm:$0xff]
    %v108 = vld [vmem:[%s98 + $0x48] sm:$0xff]
    %v109 = vld [vmem:[%s98 + $0x50] sm:$0xff]
    %v110 = vld [vmem:[%s98 + $0x58] sm:$0xff]
    %v111 = vld [vmem:[%s98 + $0x60] sm:$0xff]
    %v112 = vld [vmem:[%s98 + $0x68] sm:$0xff]
    %v113 = vld [vmem:[%s98 + $0x70] sm:$0xff]
    %v114 = vld [vmem:[%s98 + $0x78] sm:$0xff]
    %115 = vmatprep.subr.mxu0 0.0
    %116 = vmatpush1.msra.mxu0 %v99
    %117 = vmatprep.subr.mxu0 0.0
    %118 = vmatpush1.msra.mxu0 %v100
    %119 = vmatprep.subr.mxu0 0.0
    %120 = vmatpush1.msra.mxu0 %v101
    %121 = vmatprep.subr.mxu0 0.0
    %122 = vmatpush1.msra.mxu0 %v102
    %123 = vmatprep.subr.mxu0 0.0
    %124 = vmatpush1.msra.mxu0 %v103
    %125 = vmatprep.subr.mxu0 0.0
    %126 = vmatpush1.msra.mxu0 %v104
    %127 = vmatprep.subr.mxu0 0.0
    %128 = vmatpush1.msra.mxu0 %v105
    %129 = vmatprep.subr.mxu0 0.0
    %130 = vmatpush1.msra.mxu0 %v106
    %131 = vmatprep.subr.mxu0 0.0
    %132 = vmatpush1.msra.mxu0 %v107
    %133 = vmatprep.subr.mxu0 0.0
    %134 = vmatpush1.msra.mxu0 %v108
    %135 = vmatprep.subr.mxu0 0.0
    %136 = vmatpush1.msra.mxu0 %v109
    %137 = vmatprep.subr.mxu0 0.0
    %138 = vmatpush1.msra.mxu0 %v110
    %139 = vmatprep.subr.mxu0 0.0
    %140 = vmatpush1.msra.mxu0 %v111
    %141 = vmatprep.subr.mxu0 0.0
    %142 = vmatpush1.msra.mxu0 %v112
    %143 = vmatprep.subr.mxu0 0.0
    %144 = vmatpush1.msra.mxu0 %v113
    %145 = vmatprep.subr.mxu0 0.0
    %146 = vmatpush1.msra.mxu0 %v114
    %147 = vmatprep.subr.mxu0 0.0
    %148 = vmatpush1.msra.mxu0 0.0
    %149 = vmatprep.subr.mxu0 0.0
    %150 = vmatpush1.msra.mxu0 0.0
    %151 = vmatprep.subr.mxu0 0.0
    %152 = vmatpush1.msra.mxu0 0.0
    %153 = vmatprep.subr.mxu0 0.0
    %154 = vmatpush1.msra.mxu0 0.0
    %155 = vmatprep.subr.mxu0 0.0
    %156 = vmatpush1.msra.mxu0 0.0
    %157 = vmatprep.subr.mxu0 0.0
    %158 = vmatpush1.msra.mxu0 0.0
    %159 = vmatprep.subr.mxu0 0.0
    %160 = vmatpush1.msra.mxu0 0.0
    %161 = vmatprep.subr.mxu0 0.0
    %162 = vmatpush1.msra.mxu0 0.0
    %163 = vmatprep.subr.mxu0 0.0
    %164 = vmatpush1.msra.mxu0 0.0
    %165 = vmatprep.subr.mxu0 0.0
    %166 = vmatpush1.msra.mxu0 0.0
    %167 = vmatprep.subr.mxu0 0.0
    %168 = vmatpush1.msra.mxu0 0.0
    %169 = vmatprep.subr.mxu0 0.0
    %170 = vmatpush1.msra.mxu0 0.0
    %171 = vmatprep.subr.mxu0 0.0
    %172 = vmatpush1.msra.mxu0 0.0
    %173 = vmatprep.subr.mxu0 0.0
    %174 = vmatpush1.msra.mxu0 0.0
    %175 = vmatprep.subr.mxu0 0.0
    %176 = vmatpush1.msra.mxu0 0.0
    %177 = vmatprep.subr.mxu0 0.0
    %178 = vmatpush1.msra.mxu0 0.0
    %179 = vmatprep.mubr.f32.mxu0 0.0
    %180 = vmatmul.mubr.f32.gmra.mrb[0].mxu0 %v94
    %v181 = vpop.f32.mrb[0].mxu0
    %v182 = vadd.f32 0.0, %v181
    %v183 = vpop.f32.mrb[0].mxu0
    %184 = vmatprep.mubr.f32.mxu0 0.0
    %185 = vmatmul.mubr.f32.gmra.mrb[0].mxu0 %v95
    %v186 = vpop.f32.mrb[0].mxu0
    %v187 = vadd.f32 0.0, %v186
    %v188 = vpop.f32.mrb[0].mxu0
    %189 = vmatprep.mubr.f32.mxu0 0.0
    %190 = vmatmul.mubr.f32.gmra.mrb[0].mxu0 %v96
    %v191 = vpop.f32.mrb[0].mxu0
    %v192 = vadd.f32 0.0, %v191
    %v193 = vpop.f32.mrb[0].mxu0
    %194 = vmatprep.mubr.f32.mxu0 0.0
    %195 = vmatmul.mubr.f32.gmra.mrb[0].mxu0 %v97
    %v196 = vpop.f32.mrb[0].mxu0
    %v197 = vadd.f32 0.0, %v196
    %v198 = vpop.f32.mrb[0].mxu0
    %199 = vdwg.mxu0
    %200 = vmatprep.subr.mxu0 0.0
    %201 = vmatpush1.msra.mxu0 %v78
    %202 = vmatprep.subr.mxu0 0.0
    %203 = vmatpush1.msra.mxu0 %v79
    %204 = vmatprep.subr.mxu0 0.0
    %205 = vmatpush1.msra.mxu0 %v80
    %206 = vmatprep.subr.mxu0 0.0
    %207 = vmatpush1.msra.mxu0 %v81
    %208 = vmatprep.subr.mxu0 0.0
    %209 = vmatpush1.msra.mxu0 %v82
    %210 = vmatprep.subr.mxu0 0.0
    %211 = vmatpush1.msra.mxu0 %v83
    %212 = vmatprep.subr.mxu0 0.0
    %213 = vmatpush1.msra.mxu0 %v84
    %214 = vmatprep.subr.mxu0 0.0
    %215 = vmatpush1.msra.mxu0 %v85
    %216 = vmatprep.subr.mxu0 0.0
    %217 = vmatpush1.msra.mxu0 %v86
    %218 = vmatprep.subr.mxu0 0.0
    %219 = vmatpush1.msra.mxu0 %v87
    %220 = vmatprep.subr.mxu0 0.0
    %221 = vmatpush1.msra.mxu0 %v88
    %222 = vmatprep.subr.mxu0 0.0
    %223 = vmatpush1.msra.mxu0 %v89
    %224 = vmatprep.subr.mxu0 0.0
    %225 = vmatpush1.msra.mxu0 %v90
    %226 = vmatprep.subr.mxu0 0.0
    %227 = vmatpush1.msra.mxu0 %v91
    %228 = vmatprep.subr.mxu0 0.0
    %229 = vmatpush1.msra.mxu0 %v92
    %230 = vmatprep.subr.mxu0 0.0
    %231 = vmatpush1.msra.mxu0 %v93
    %232 = vmatprep.subr.mxu0 0.0
    %233 = vmatpush1.msra.mxu0 0.0
    %234 = vmatprep.subr.mxu0 0.0
    %235 = vmatpush1.msra.mxu0 0.0
    %236 = vmatprep.subr.mxu0 0.0
    %237 = vmatpush1.msra.mxu0 0.0
    %238 = vmatprep.subr.mxu0 0.0
    %239 = vmatpush1.msra.mxu0 0.0
    %240 = vmatprep.subr.mxu0 0.0
    %241 = vmatpush1.msra.mxu0 0.0
    %242 = vmatprep.subr.mxu0 0.0
    %243 = vmatpush1.msra.mxu0 0.0
    %244 = vmatprep.subr.mxu0 0.0
    %245 = vmatpush1.msra.mxu0 0.0
    %246 = vmatprep.subr.mxu0 0.0
    %247 = vmatpush1.msra.mxu0 0.0
    %248 = vmatprep.subr.mxu0 0.0
    %249 = vmatpush1.msra.mxu0 0.0
    %250 = vmatprep.subr.mxu0 0.0
    %251 = vmatpush1.msra.mxu0 0.0
    %252 = vmatprep.subr.mxu0 0.0
    %253 = vmatpush1.msra.mxu0 0.0
    %254 = vmatprep.subr.mxu0 0.0
    %255 = vmatpush1.msra.mxu0 0.0
    %256 = vmatprep.subr.mxu0 0.0
    %257 = vmatpush1.msra.mxu0 0.0
    %258 = vmatprep.subr.mxu0 0.0
    %259 = vmatpush1.msra.mxu0 0.0
    %260 = vmatprep.subr.mxu0 0.0
    %261 = vmatpush1.msra.mxu0 0.0
    %262 = vmatprep.subr.mxu0 0.0
    %263 = vmatpush1.msra.mxu0 0.0
    %264 = vmatprep.mubr.f32.mxu0 0.0
    %265 = vmatmul.mubr.f32.gmra.mrb[0].mxu0 %v74
    %v266 = vpop.f32.mrb[0].mxu0
    %v267 = vadd.f32 %v182, %v266
    %v268 = vpop.f32.mrb[0].mxu0
    %269 = vmatprep.mubr.f32.mxu0 0.0
    %270 = vmatmul.mubr.f32.gmra.mrb[0].mxu0 %v75
    %v271 = vpop.f32.mrb[0].mxu0
    %v272 = vadd.f32 %v187, %v271
    %v273 = vpop.f32.mrb[0].mxu0
    %274 = vmatprep.mubr.f32.mxu0 0.0
    %275 = vmatmul.mubr.f32.gmra.mrb[0].mxu0 %v76
    %v276 = vpop.f32.mrb[0].mxu0
    %v277 = vadd.f32 %v192, %v276
    %v278 = vpop.f32.mrb[0].mxu0
    %279 = vmatprep.mubr.f32.mxu0 0.0
    %280 = vmatmul.mubr.f32.gmra.mrb[0].mxu0 %v77
    %v281 = vpop.f32.mrb[0].mxu0
    %v282 = vadd.f32 %v197, %v281
    %v283 = vpop.f32.mrb[0].mxu0
    %284 = vdwg.mxu0
    %v285 = vld [vmem:[#allocation2 + $0x4] sm:$0xff]
    %v286 = vld [vmem:[#allocation2 + $0xc] sm:$0xff]
    %v287 = vld [vmem:[#allocation2 + $0x1c] sm:$0xff]
    %v288 = vld [vmem:[#allocation2 + $0x24] sm:$0xff]
    %s289 = scalar_lea.vmem [#allocation6], 256
    %v290 = vld [vmem:[%s289] sm:$0xff]
    %v291 = vld [vmem:[%s289 + $0x8] sm:$0xff]
    %v292 = vld [vmem:[%s289 + $0x10] sm:$0xff]
    %v293 = vld [vmem:[%s289 + $0x18] sm:$0xff]
    %v294 = vld [vmem:[%s289 + $0x20] sm:$0xff]
    %v295 = vld [vmem:[%s289 + $0x28] sm:$0xff]
    %v296 = vld [vmem:[%s289 + $0x30] sm:$0xff]
    %v297 = vld [vmem:[%s289 + $0x38] sm:$0xff]
    %v298 = vld [vmem:[%s289 + $0x40] sm:$0xff]
    %v299 = vld [vmem:[%s289 + $0x48] sm:$0xff]
    %v300 = vld [vmem:[%s289 + $0x50] sm:$0xff]
    %v301 = vld [vmem:[%s289 + $0x58] sm:$0xff]
    %v302 = vld [vmem:[%s289 + $0x60] sm:$0xff]
    %v303 = vld [vmem:[%s289 + $0x68] sm:$0xff]
    %v304 = vld [vmem:[%s289 + $0x70] sm:$0xff]
    %v305 = vld [vmem:[%s289 + $0x78] sm:$0xff]
    %306 = vmatprep.subr.mxu0 0.0
    %307 = vmatpush1.msra.mxu0 %v290
    %308 = vmatprep.subr.mxu0 0.0
    %309 = vmatpush1.msra.mxu0 %v291
    %310 = vmatprep.subr.mxu0 0.0
    %311 = vmatpush1.msra.mxu0 %v292
    %312 = vmatprep.subr.mxu0 0.0
    %313 = vmatpush1.msra.mxu0 %v293
    %314 = vmatprep.subr.mxu0 0.0
    %315 = vmatpush1.msra.mxu0 %v294
    %316 = vmatprep.subr.mxu0 0.0
    %317 = vmatpush1.msra.mxu0 %v295
    %318 = vmatprep.subr.mxu0 0.0
    %319 = vmatpush1.msra.mxu0 %v296
    %320 = vmatprep.subr.mxu0 0.0
    %321 = vmatpush1.msra.mxu0 %v297
    %322 = vmatprep.subr.mxu0 0.0
    %323 = vmatpush1.msra.mxu0 %v298
    %324 = vmatprep.subr.mxu0 0.0
    %325 = vmatpush1.msra.mxu0 %v299
    %326 = vmatprep.subr.mxu0 0.0
    %327 = vmatpush1.msra.mxu0 %v300
    %328 = vmatprep.subr.mxu0 0.0
    %329 = vmatpush1.msra.mxu0 %v301
    %330 = vmatprep.subr.mxu0 0.0
    %331 = vmatpush1.msra.mxu0 %v302
    %332 = vmatprep.subr.mxu0 0.0
    %333 = vmatpush1.msra.mxu0 %v303
    %334 = vmatprep.subr.mxu0 0.0
    %335 = vmatpush1.msra.mxu0 %v304
    %336 = vmatprep.subr.mxu0 0.0
    %337 = vmatpush1.msra.mxu0 %v305
    %338 = vmatprep.subr.mxu0 0.0
    %339 = vmatpush1.msra.mxu0 0.0
    %340 = vmatprep.subr.mxu0 0.0
    %341 = vmatpush1.msra.mxu0 0.0
    %342 = vmatprep.subr.mxu0 0.0
    %343 = vmatpush1.msra.mxu0 0.0
    %344 = vmatprep.subr.mxu0 0.0
    %345 = vmatpush1.msra.mxu0 0.0
    %346 = vmatprep.subr.mxu0 0.0
    %347 = vmatpush1.msra.mxu0 0.0
    %348 = vmatprep.subr.mxu0 0.0
    %349 = vmatpush1.msra.mxu0 0.0
    %350 = vmatprep.subr.mxu0 0.0
    %351 = vmatpush1.msra.mxu0 0.0
    %352 = vmatprep.subr.mxu0 0.0
    %353 = vmatpush1.msra.mxu0 0.0
    %354 = vmatprep.subr.mxu0 0.0
    %355 = vmatpush1.msra.mxu0 0.0
    %356 = vmatprep.subr.mxu0 0.0
    %357 = vmatpush1.msra.mxu0 0.0
    %358 = vmatprep.subr.mxu0 0.0
    %359 = vmatpush1.msra.mxu0 0.0
    %360 = vmatprep.subr.mxu0 0.0
    %361 = vmatpush1.msra.mxu0 0.0
    %362 = vmatprep.subr.mxu0 0.0
    %363 = vmatpush1.msra.mxu0 0.0
    %364 = vmatprep.subr.mxu0 0.0
    %365 = vmatpush1.msra.mxu0 0.0
    %366 = vmatprep.subr.mxu0 0.0
    %367 = vmatpush1.msra.mxu0 0.0
    %368 = vmatprep.subr.mxu0 0.0
    %369 = vmatpush1.msra.mxu0 0.0
    %370 = vmatprep.mubr.f32.mxu0 0.0
    %371 = vmatmul.mubr.f32.gmra.mrb[0].mxu0 %v285
    %v372 = vpop.f32.mrb[0].mxu0
    %v373 = vadd.f32 0.0, %v372
    %v374 = vpop.f32.mrb[0].mxu0
    %375 = vmatprep.mubr.f32.mxu0 0.0
    %376 = vmatmul.mubr.f32.gmra.mrb[0].mxu0 %v286
    %v377 = vpop.f32.mrb[0].mxu0
    %v378 = vadd.f32 0.0, %v377
    %v379 = vpop.f32.mrb[0].mxu0
    %380 = vmatprep.mubr.f32.mxu0 0.0
    %381 = vmatmul.mubr.f32.gmra.mrb[0].mxu0 %v287
    %v382 = vpop.f32.mrb[0].mxu0
    %v383 = vadd.f32 0.0, %v382
    %v384 = vpop.f32.mrb[0].mxu0
    %385 = vmatprep.mubr.f32.mxu0 0.0
    %386 = vmatmul.mubr.f32.gmra.mrb[0].mxu0 %v288
    %v387 = vpop.f32.mrb[0].mxu0
    %v388 = vadd.f32 0.0, %v387
    %v389 = vpop.f32.mrb[0].mxu0
    %390 = vdwg.mxu0
    %v391 = vadd.f32 %v267, %v373
    %v392 = vadd.f32 %v272, %v378
    %v393 = vadd.f32 %v277, %v383
    %v394 = vadd.f32 %v282, %v388
    %v395 = vld [vmem:[#allocation8] sm:$0xff]
    %v396 = vld [vmem:[#allocation8 + $0x8] sm:$0xff]
    %v397 = vld [vmem:[#allocation8 + $0x10] sm:$0xff]
    %v398 = vld [vmem:[#allocation8 + $0x18] sm:$0xff]
    %v399 = vld [vmem:[#allocation8 + $0x20] sm:$0xff]
    %v400 = vld [vmem:[#allocation8 + $0x28] sm:$0xff]
    %v401 = vld [vmem:[#allocation8 + $0x30] sm:$0xff]
    %v402 = vld [vmem:[#allocation8 + $0x38] sm:$0xff]
    %v403 = vld [vmem:[#allocation8 + $0x40] sm:$0xff]
    %v404 = vld [vmem:[#allocation8 + $0x48] sm:$0xff]
    %v405 = vld [vmem:[#allocation8 + $0x50] sm:$0xff]
    %v406 = vld [vmem:[#allocation8 + $0x58] sm:$0xff]
    %v407 = vld [vmem:[#allocation8 + $0x60] sm:$0xff]
    %v408 = vld [vmem:[#allocation8 + $0x68] sm:$0xff]
    %v409 = vld [vmem:[#allocation8 + $0x70] sm:$0xff]
    %v410 = vld [vmem:[#allocation8 + $0x78] sm:$0xff]
    %411 = vmatprep.subr.mxu0 0.0
    %412 = vmatpush1.msra.mxu0 %v395
    %413 = vmatprep.subr.mxu0 0.0
    %414 = vmatpush1.msra.mxu0 %v396
    %415 = vmatprep.subr.mxu0 0.0
    %416 = vmatpush1.msra.mxu0 %v397
    %417 = vmatprep.subr.mxu0 0.0
    %418 = vmatpush1.msra.mxu0 %v398
    %419 = vmatprep.subr.mxu0 0.0
    %420 = vmatpush1.msra.mxu0 %v399
    %421 = vmatprep.subr.mxu0 0.0
    %422 = vmatpush1.msra.mxu0 %v400
    %423 = vmatprep.subr.mxu0 0.0
    %424 = vmatpush1.msra.mxu0 %v401
    %425 = vmatprep.subr.mxu0 0.0
    %426 = vmatpush1.msra.mxu0 %v402
    %427 = vmatprep.subr.mxu0 0.0
    %428 = vmatpush1.msra.mxu0 %v403
    %429 = vmatprep.subr.mxu0 0.0
    %430 = vmatpush1.msra.mxu0 %v404
    %431 = vmatprep.subr.mxu0 0.0
    %432 = vmatpush1.msra.mxu0 %v405
    %433 = vmatprep.subr.mxu0 0.0
    %434 = vmatpush1.msra.mxu0 %v406
    %435 = vmatprep.subr.mxu0 0.0
    %436 = vmatpush1.msra.mxu0 %v407
    %437 = vmatprep.subr.mxu0 0.0
    %438 = vmatpush1.msra.mxu0 %v408
    %439 = vmatprep.subr.mxu0 0.0
    %440 = vmatpush1.msra.mxu0 %v409
    %441 = vmatprep.subr.mxu0 0.0
    %442 = vmatpush1.msra.mxu0 %v410
    %443 = vmatprep.subr.mxu0 0.0
    %444 = vmatpush1.msra.mxu0 0.0
    %445 = vmatprep.subr.mxu0 0.0
    %446 = vmatpush1.msra.mxu0 0.0
    %447 = vmatprep.subr.mxu0 0.0
    %448 = vmatpush1.msra.mxu0 0.0
    %449 = vmatprep.subr.mxu0 0.0
    %450 = vmatpush1.msra.mxu0 0.0
    %451 = vmatprep.subr.mxu0 0.0
    %452 = vmatpush1.msra.mxu0 0.0
    %453 = vmatprep.subr.mxu0 0.0
    %454 = vmatpush1.msra.mxu0 0.0
    %455 = vmatprep.subr.mxu0 0.0
    %456 = vmatpush1.msra.mxu0 0.0
    %457 = vmatprep.subr.mxu0 0.0
    %458 = vmatpush1.msra.mxu0 0.0
    %459 = vmatprep.subr.mxu0 0.0
    %460 = vmatpush1.msra.mxu0 0.0
    %461 = vmatprep.subr.mxu0 0.0
    %462 = vmatpush1.msra.mxu0 0.0
    %463 = vmatprep.subr.mxu0 0.0
    %464 = vmatpush1.msra.mxu0 0.0
    %465 = vmatprep.subr.mxu0 0.0
    %466 = vmatpush1.msra.mxu0 0.0
    %467 = vmatprep.subr.mxu0 0.0
    %468 = vmatpush1.msra.mxu0 0.0
    %469 = vmatprep.subr.mxu0 0.0
    %470 = vmatpush1.msra.mxu0 0.0
    %471 = vmatprep.subr.mxu0 0.0
    %472 = vmatpush1.msra.mxu0 0.0
    %473 = vmatprep.subr.mxu0 0.0
    %474 = vmatpush1.msra.mxu0 0.0
    %475 = vmatprep.mubr.f32.mxu0 0.0
    %476 = vmatmul.mubr.f32.gmra.mrb[0].mxu0 %v391
    %v477 = vpop.f32.mrb[0].mxu0
    %v478 = vadd.f32 0.0, %v477
    %v479 = vpop.f32.mrb[0].mxu0
    %480 = vmatprep.mubr.f32.mxu0 0.0
    %481 = vmatmul.mubr.f32.gmra.mrb[0].mxu0 %v392
    %v482 = vpop.f32.mrb[0].mxu0
    %v483 = vadd.f32 0.0, %v482
    %v484 = vpop.f32.mrb[0].mxu0
    %485 = vmatprep.mubr.f32.mxu0 0.0
    %486 = vmatmul.mubr.f32.gmra.mrb[0].mxu0 %v393
    %v487 = vpop.f32.mrb[0].mxu0
    %v488 = vadd.f32 0.0, %v487
    %v489 = vpop.f32.mrb[0].mxu0
    %490 = vmatprep.mubr.f32.mxu0 0.0
    %491 = vmatmul.mubr.f32.gmra.mrb[0].mxu0 %v394
    %v492 = vpop.f32.mrb[0].mxu0
    %v493 = vadd.f32 0.0, %v492
    %v494 = vpop.f32.mrb[0].mxu0
    %495 = vdwg.mxu0
    %v496 = vadd.f32 %v478, %v483
    %v497 = vadd.f32 %v496, %v488
    %v498 = vadd.f32 %v497, %v493
    %v499 = vrot.slane %v498, 4
    %v500 = vadd.f32 %v498, %v499
    %v501 = vrot.slane %v500, 2
    %v502 = vadd.f32 %v500, %v501
    %v503 = vrot.slane %v502, 1
    %v504 = vadd.f32 %v502, %v503
    %v505 = vmul.f32 %v504, 0.001953125
    %v506 = vsub.f32 %v391, %v505
    %v507 = vsub.f32 %v392, %v505
    %v508 = vsub.f32 %v393, %v505
    %v509 = vsub.f32 %v394, %v505
    %v510 = vmul.f32 %v506, %v506
    %v511 = vmul.f32 %v507, %v507
    %v512 = vmul.f32 %v508, %v508
    %v513 = vmul.f32 %v509, %v509
    %514 = vmatprep.subr.mxu0 0.0
    %515 = vmatpush1.msra.mxu0 %v395
    %516 = vmatprep.subr.mxu0 0.0
    %517 = vmatpush1.msra.mxu0 %v396
    %518 = vmatprep.subr.mxu0 0.0
    %519 = vmatpush1.msra.mxu0 %v397
    %520 = vmatprep.subr.mxu0 0.0
    %521 = vmatpush1.msra.mxu0 %v398
    %522 = vmatprep.subr.mxu0 0.0
    %523 = vmatpush1.msra.mxu0 %v399
    %524 = vmatprep.subr.mxu0 0.0
    %525 = vmatpush1.msra.mxu0 %v400
    %526 = vmatprep.subr.mxu0 0.0
    %527 = vmatpush1.msra.mxu0 %v401
    %528 = vmatprep.subr.mxu0 0.0
    %529 = vmatpush1.msra.mxu0 %v402
    %530 = vmatprep.subr.mxu0 0.0
    %531 = vmatpush1.msra.mxu0 %v403
    %532 = vmatprep.subr.mxu0 0.0
    %533 = vmatpush1.msra.mxu0 %v404
    %534 = vmatprep.subr.mxu0 0.0
    %535 = vmatpush1.msra.mxu0 %v405
    %536 = vmatprep.subr.mxu0 0.0
    %537 = vmatpush1.msra.mxu0 %v406
    %538 = vmatprep.subr.mxu0 0.0
    %539 = vmatpush1.msra.mxu0 %v407
    %540 = vmatprep.subr.mxu0 0.0
    %541 = vmatpush1.msra.mxu0 %v408
    %542 = vmatprep.subr.mxu0 0.0
    %543 = vmatpush1.msra.mxu0 %v409
    %544 = vmatprep.subr.mxu0 0.0
    %545 = vmatpush1.msra.mxu0 %v410
    %546 = vmatprep.subr.mxu0 0.0
    %547 = vmatpush1.msra.mxu0 0.0
    %548 = vmatprep.subr.mxu0 0.0
    %549 = vmatpush1.msra.mxu0 0.0
    %550 = vmatprep.subr.mxu0 0.0
    %551 = vmatpush1.msra.mxu0 0.0
    %552 = vmatprep.subr.mxu0 0.0
    %553 = vmatpush1.msra.mxu0 0.0
    %554 = vmatprep.subr.mxu0 0.0
    %555 = vmatpush1.msra.mxu0 0.0
    %556 = vmatprep.subr.mxu0 0.0
    %557 = vmatpush1.msra.mxu0 0.0
    %558 = vmatprep.subr.mxu0 0.0
    %559 = vmatpush1.msra.mxu0 0.0
    %560 = vmatprep.subr.mxu0 0.0
    %561 = vmatpush1.msra.mxu0 0.0
    %562 = vmatprep.subr.mxu0 0.0
    %563 = vmatpush1.msra.mxu0 0.0
    %564 = vmatprep.subr.mxu0 0.0
    %565 = vmatpush1.msra.mxu0 0.0
    %566 = vmatprep.subr.mxu0 0.0
    %567 = vmatpush1.msra.mxu0 0.0
    %568 = vmatprep.subr.mxu0 0.0
    %569 = vmatpush1.msra.mxu0 0.0
    %570 = vmatprep.subr.mxu0 0.0
    %571 = vmatpush1.msra.mxu0 0.0
    %572 = vmatprep.subr.mxu0 0.0
    %573 = vmatpush1.msra.mxu0 0.0
    %574 = vmatprep.subr.mxu0 0.0
    %575 = vmatpush1.msra.mxu0 0.0
    %576 = vmatprep.subr.mxu0 0.0
    %577 = vmatpush1.msra.mxu0 0.0
    %578 = vmatprep.mubr.f32.mxu0 0.0
    %579 = vmatmul.mubr.f32.gmra.mrb[0].mxu0 %v510
    %v580 = vpop.f32.mrb[0].mxu0
    %v581 = vadd.f32 0.0, %v580
    %v582 = vpop.f32.mrb[0].mxu0
    %583 = vmatprep.mubr.f32.mxu0 0.0
    %584 = vmatmul.mubr.f32.gmra.mrb[0].mxu0 %v511
    %v585 = vpop.f32.mrb[0].mxu0
    %v586 = vadd.f32 0.0, %v585
    %v587 = vpop.f32.mrb[0].mxu0
    %588 = vmatprep.mubr.f32.mxu0 0.0
    %589 = vmatmul.mubr.f32.gmra.mrb[0].mxu0 %v512
    %v590 = vpop.f32.mrb[0].mxu0
    %v591 = vadd.f32 0.0, %v590
    %v592 = vpop.f32.mrb[0].mxu0
    %593 = vmatprep.mubr.f32.mxu0 0.0
    %594 = vmatmul.mubr.f32.gmra.mrb[0].mxu0 %v513
    %v595 = vpop.f32.mrb[0].mxu0
    %v596 = vadd.f32 0.0, %v595
    %v597 = vpop.f32.mrb[0].mxu0
    %598 = vdwg.mxu0
    %v599 = vadd.f32 %v581, %v586
    %v600 = vadd.f32 %v599, %v591
    %v601 = vadd.f32 %v600, %v596
    %v602 = vrot.slane %v601, 4
    %v603 = vadd.f32 %v601, %v602
    %v604 = vrot.slane %v603, 2
    %v605 = vadd.f32 %v603, %v604
    %v606 = vrot.slane %v605, 1
    %v607 = vadd.f32 %v605, %v606
    %v608 = vmul.f32 %v607, 0.001953125
    %v609 = vadd.f32 %v608, 1e-05
    %v610 = vrsqrt.pop %v609
    %v611 = vmul.f32 %v506, %v610
    %v612 = vmul.f32 %v507, %v610
    %v613 = vmul.f32 %v508, %v610
    %v614 = vmul.f32 %v509, %v610
    %v615 = vld [vmem:[%s3] sm:$0x1]
    %v617 = vlaneseq
    %v618 = vshrl.u32 %v617, 7
    %v619 = vsub.s32 0, %v618
    %v620 = vrot.slane %v615, %v619
    %v622 = vmul.f32 %v611, %v620
    %v623 = vmul.f32 %v612, %v620
    %v624 = vmul.f32 %v613, %v620
    %v625 = vmul.f32 %v614, %v620
    %v626 = vld [vmem:[%s4] sm:$0x1]
    %v628 = vlaneseq
    %v629 = vshrl.u32 %v628, 7
    %v630 = vsub.s32 0, %v629
    %v631 = vrot.slane %v626, %v630
    %v633 = vadd.f32 %v622, %v631
    %v634 = vadd.f32 %v623, %v631
    %v635 = vadd.f32 %v624, %v631
    %v636 = vadd.f32 %v625, %v631
    %637 = vst [vmem:[#allocation9] sm:$0xff] %v633
    %638 = vst [vmem:[#allocation9 + $0x8] sm:$0xff] %v634
    %639 = vst [vmem:[#allocation9 + $0x10] sm:$0xff] %v635
    %640 = vst [vmem:[#allocation9 + $0x18] sm:$0xff] %v636
    // Predicated region
    $region34: #{tpu_custom_call.1} parent=1 // pred_check
      _
    $region35: #{tpu_custom_call.1} parent=1 // pred_check_branch
      %642 = sbr.rel (0) target = $region37
    $region36: #{tpu_custom_call.1} parent=1 // pred_region
      %s644 = ssub.s32 512, 512
      %645 = vsyncadd [#allocation5], %s644
      %s646 = sshll.u32 [#allocation9], 4
      %s647 = int_to_ptr.vmem [resolvable:$true] %s646
      %652 = dma.vmem_to_hbm [thread:$0]  %s647, 512, %s5, [#allocation5], 128, 128, 8
    $region37: #{tpu_custom_call.1} parent=1 // pred_fallthru
      _
    // Predicated region
    $region38: #{tpu_custom_call.1} parent=1 // pred_check
      _
    $region39: #{tpu_custom_call.1} parent=1 // pred_check_branch
      %654 = sbr.rel (0) target = $region41
    $region40: #{tpu_custom_call.1} parent=1 // pred_region
      %655 = dma.done [#allocation5], 512
    $region41: #{tpu_custom_call.1} parent=1 // pred_fallthru
      _
    %656 = vsyncpa [#allocation4], 1
    %657 = vsyncpa [#allocation7], 1
    %658 = vsyncpa [#allocation5], 1

</llo_original>
